<compile_context>
chip_gen: v7x
topology: tpu7x:2x2x1
jax: 0.10.0
libtpu: 0.0.40
codegen_flags: <defaults>
</compile_context>

<pallas_src>
import math

import jax
import jax.numpy as jnp
from jax.experimental import pallas as pl
from jax.experimental.pallas import tpu as pltpu

_TWO_PI = 2.0 * math.pi


# ----------------------------------------------------------------------------
# Fused kernel: one batch element per grid step.
# ----------------------------------------------------------------------------
def _make_fused_kernel(min_val: float, max_val: float, s: int):
    inv_range = 1.0 / (max_val - min_val)

    def kernel(t5_ref, mask_ref, sec_ref, pw_ref, pb_ref,
               wf_ref, wx_ref, wsc_ref, nb_ref, out_ref):
        # t5_ref:   (s, H)            bf16  T5 last_hidden_state slice
        # mask_ref: (s, 1)            f32   attention mask
        # sec_ref:  (1, 1)            f32   seconds_total
        # pw_ref:   (H, F)            bf16  proj_out weight (K-major)
        # pb_ref:   (1, F)            f32   proj_out bias
        # wf_ref:   (1, half_dim)     f32   fourier_w * 2*pi
        # wx_ref:   (1, F)            f32   Linear row for the raw value
        # wsc_ref:  (2*half_dim, F)   f32   Linear rows for [sin | cos]
        # nb_ref:   (1, F)            f32   Linear bias
        # out_ref:  (s + 1, F)              fused cross-attention buffer

        # ---- T5 branch: rows [0, s) --------------------------------------
        y = jnp.dot(t5_ref[...], pw_ref[...],
                    preferred_element_type=jnp.float32)            # (s, F)
        out_ref[:s, :] = ((y + pb_ref[...]) * mask_ref[...]).astype(out_ref.dtype)

        # ---- NumberConditioner branch: row s (all f32) --------------------
        x = jnp.clip(sec_ref[...], min_val, max_val)                # (1, 1)
        x = (x - min_val) * inv_range                               # in [0, 1]
        freqs = x * wf_ref[...]                                     # (1, half_dim)
        # lane-aligned concat -> single K = 2*half_dim dot
        sc = jnp.concatenate([jnp.sin(freqs), jnp.cos(freqs)], axis=-1)
        emb = x * wx_ref[...] + nb_ref[...] + jnp.dot(
            sc, wsc_ref[...], preferred_element_type=jnp.float32)   # (1, F)
        out_ref[s:s + 1, :] = emb.astype(out_ref.dtype)

    return kernel


# ----------------------------------------------------------------------------
# Forward wrapper (ConditionersModule.forward, minus the T5 encoder itself)
# ----------------------------------------------------------------------------
def conditioners_module_forward(t5_last_hidden_state, attention_mask,
                                seconds_total, params, *, min_val, max_val,
                                mxu_dtype=jnp.bfloat16, out_dtype=jnp.float32,
                                max_cross_len=64):
    """Returns (cross_attention_input (B, S+1, F), cross_attention_masks
    (B, S+1), global_cond (B, F)) from a precomputed T5 last_hidden_state."""
    if not (max_val > min_val):
        raise ValueError("max_val must be strictly greater than min_val")
    b, s_in, h = t5_last_hidden_state.shape
    s = min(max_cross_len, s_in)
    feat = params["proj_w"].shape[1]
    half_dim = params["fourier_w"].shape[0]

    # Per-batch activations (T5 stream kept in bf16; masks/scalars in f32).
    t5 = t5_last_hidden_state[:, :s, :].astype(mxu_dtype)
    m = attention_mask[:, :s].astype(jnp.float32)
    m3 = m.reshape(b, s, 1)
    sec = seconds_total.reshape(b, 1, 1).astype(jnp.float32)

    # Weights (constants folded; number-conditioner weights stay f32).
    pw = params["proj_w"].astype(mxu_dtype)                            # (H, F)
    pb = params["proj_b"].astype(jnp.float32).reshape(1, feat)
    wf = (params["fourier_w"].astype(jnp.float32) * _TWO_PI).reshape(1, half_dim)
    lw = params["linear_w"].astype(jnp.float32)                        # (1+2*half_dim, F)
    wx = lw[0:1, :]
    wsc = lw[1:, :]
    nb = params["linear_b"].astype(jnp.float32).reshape(1, feat)

    cross = pl.pallas_call(
        _make_fused_kernel(float(min_val), float(max_val), s),
        out_shape=jax.ShapeDtypeStruct((b, s + 1, feat), out_dtype),
        grid=(b,),
        in_specs=[
            pl.BlockSpec((None, s, h), lambda i: (i, 0, 0)),           # t5
            pl.BlockSpec((None, s, 1), lambda i: (i, 0, 0)),           # mask
            pl.BlockSpec((None, 1, 1), lambda i: (i, 0, 0)),           # seconds
            pl.BlockSpec((h, feat), lambda i: (0, 0)),                 # proj_w
            pl.BlockSpec((1, feat), lambda i: (0, 0)),                 # proj_b
            pl.BlockSpec((1, half_dim), lambda i: (0, 0)),             # fourier_w*2pi
            pl.BlockSpec((1, feat), lambda i: (0, 0)),                 # wx
            pl.BlockSpec((2 * half_dim, feat), lambda i: (0, 0)),      # wsc
            pl.BlockSpec((1, feat), lambda i: (0, 0)),                 # linear_b
        ],
        out_specs=pl.BlockSpec((None, s + 1, feat), lambda i: (i, 0, 0)),
        compiler_params=pltpu.CompilerParams(
            dimension_semantics=("parallel",)),
    )(t5, m3, sec, pw, pb, wf, wx, wsc, nb)

    cross_attention_masks = jnp.concatenate(
        [m, jnp.ones((b, 1), jnp.float32)], axis=1)                    # (B, S+1)
    global_cond = cross[:, s, :].astype(jnp.float32)                   # (B, F)
    return cross, cross_attention_masks, global_cond


# ----------------------------------------------------------------------------
# Parameters and pure-f32 reference (PyTorch numerics)
# ----------------------------------------------------------------------------
def init_params(key, features, dim=256, t5_hidden=128, dtype=jnp.float32):
    """Synthetic params matching NumberEmbedder(features, dim) + proj_out Linear.
    linear_w / proj_w are stored K-major (transpose of torch nn.Linear.weight)."""
    assert dim % 2 == 0
    half_dim = dim // 2
    k1, k2, k3, k4, k5 = jax.random.split(key, 5)
    bound = 1.0 / math.sqrt(dim + 1)
    pbound = 1.0 / math.sqrt(t5_hidden)
    return {
        "fourier_w": jax.random.normal(k1, (half_dim,), dtype),
        "linear_w": jax.random.uniform(k2, (dim + 1, features), dtype, -bound, bound),
        "linear_b": jax.random.uniform(k3, (features,), dtype, -bound, bound),
        "proj_w": jax.random.uniform(k4, (t5_hidden, features), dtype, -pbound, pbound),
        "proj_b": jax.random.uniform(k5, (features,), dtype, -pbound, pbound),
    }


def _ref_conditioners_f32(t5_last_hidden_state, attention_mask, seconds, params,
                          *, min_val, max_val, max_cross_len=64):
    """Pure-f32 reference mirroring the PyTorch ConditionersModule exactly."""
    b, s_in, _ = t5_last_hidden_state.shape
    s = min(max_cross_len, s_in)
    t = t5_last_hidden_state[:, :s, :].astype(jnp.float32)
    m = attention_mask[:, :s].astype(jnp.float32)
    proj = jnp.einsum("bsh,hf->bsf", t, params["proj_w"].astype(jnp.float32),
                      precision=jax.lax.Precision.HIGHEST)
    proj = (proj + params["proj_b"].astype(jnp.float32)[None, None, :]) * m[..., None]

    x = jnp.clip(seconds.astype(jnp.float32), min_val, max_val)
    x = (x - min_val) / (max_val - min_val)
    xc = x[:, None]
    freqs = xc * params["fourier_w"].astype(jnp.float32)[None, :] * _TWO_PI
    fouriered = jnp.concatenate([xc, jnp.sin(freqs), jnp.cos(freqs)], axis=-1)
    emb = jnp.dot(fouriered, params["linear_w"].astype(jnp.float32),
                  precision=jax.lax.Precision.HIGHEST) \
        + params["linear_b"].astype(jnp.float32)

    cross = jnp.concatenate([proj, emb[:, None, :]], axis=1)
    masks = jnp.concatenate([m, jnp.ones((b, 1), jnp.float32)], axis=1)
    return cross, masks, emb


if __name__ == "__main__":
    B = 2              # batch
    SEQ_IN = 72        # raw T5 sequence length (module slices to 64)
    T5_HIDDEN = 128    # width of the T5 last_hidden_state
    FEATURES = 32      # conditioner output dim
    DIM = 256          # NumberEmbedder internal dim (half_dim = 128)
    MIN_VAL, MAX_VAL = 0.0, 512.0

    key = jax.random.PRNGKey(0)
    k_params, k_t5 = jax.random.split(key, 2)
    params = init_params(k_params, FEATURES, DIM, T5_HIDDEN)

    # T5 encoders emit bf16 on TPU; feed the kernel bf16 directly (no cast pass).
    t5_hidden = jax.random.normal(k_t5, (B, SEQ_IN, T5_HIDDEN), jnp.bfloat16)
    lengths = jnp.array([[40], [60]], jnp.int32)
    attention_mask = (jnp.arange(SEQ_IN)[None, :] < lengths).astype(jnp.int32)
    # One value below min_val to exercise the clamp, one in range.
    seconds_total = jnp.array([-20.0, 337.5], jnp.float32)

    cross, masks, global_cond = conditioners_module_forward(
        t5_hidden, attention_mask, seconds_total, params,
        min_val=MIN_VAL, max_val=MAX_VAL)
    cross = jax.block_until_ready(cross)
    masks = jax.block_until_ready(masks)
    global_cond = jax.block_until_ready(global_cond)

    assert cross.shape == (B, 65, FEATURES)
    assert masks.shape == (B, 65)
    assert global_cond.shape == (B, FEATURES)

    # Fidelity vs the pure-f32 reference (original PyTorch numerics).
    r_cross, r_masks, r_g = _ref_conditioners_f32(
        t5_hidden, attention_mask, seconds_total, params,
        min_val=MIN_VAL, max_val=MAX_VAL)
    # T5 rows: bf16 weights at the MXU -> loose tolerance.
    assert jnp.allclose(cross, r_cross, atol=3e-2, rtol=3e-2), \
        float(jnp.max(jnp.abs(cross - r_cross)))
    # Seconds row stays f32 end-to-end -> tighter tolerance.
    assert jnp.allclose(global_cond, r_g, atol=1e-2, rtol=1e-2), \
        float(jnp.max(jnp.abs(global_cond - r_g)))
    assert jnp.allclose(cross[:, 64, :], global_cond)
    assert jnp.allclose(masks, r_masks)

    print("KERNEL_OK")
</pallas_src>

<mosaic_0001>
module attributes {stable_mosaic.version = 11 : i64} {
  func.func @kernel(%arg0: i32, %arg1: memref<1x64x128xbf16, #tpu.memory_space<vmem>>, %arg2: memref<1x64x1xf32, #tpu.memory_space<vmem>>, %arg3: memref<1x1x1xf32, #tpu.memory_space<vmem>>, %arg4: memref<128x32xbf16, #tpu.memory_space<vmem>>, %arg5: memref<1x32xf32, #tpu.memory_space<vmem>>, %arg6: memref<1x128xf32, #tpu.memory_space<vmem>>, %arg7: memref<1x32xf32, #tpu.memory_space<vmem>>, %arg8: memref<256x32xf32, #tpu.memory_space<vmem>>, %arg9: memref<1x32xf32, #tpu.memory_space<vmem>>, %arg10: memref<1x65x32xf32, #tpu.memory_space<vmem>>) attributes {dimension_semantics = [#tpu.dimension_semantics<parallel>], iteration_bounds = array<i64: 2>, scalar_prefetch = 0 : i64, scratch_operands = 0 : i64, tpu.core_type = #tpu.core_type<tc>, window_params = [{transform_indices = @transform_0, window_bounds = array<i64: 1, 64, 128>}, {transform_indices = @transform_1, window_bounds = array<i64: 1, 64, 1>}, {transform_indices = @transform_2, window_bounds = array<i64: 1, 1, 1>}, {pipeline_mode = #tpu.pipeline_mode<synchronous>, transform_indices = @transform_3, window_bounds = array<i64: 128, 32>}, {pipeline_mode = #tpu.pipeline_mode<synchronous>, transform_indices = @transform_4, window_bounds = array<i64: 1, 32>}, {pipeline_mode = #tpu.pipeline_mode<synchronous>, transform_indices = @transform_5, window_bounds = array<i64: 1, 128>}, {pipeline_mode = #tpu.pipeline_mode<synchronous>, transform_indices = @transform_6, window_bounds = array<i64: 1, 32>}, {pipeline_mode = #tpu.pipeline_mode<synchronous>, transform_indices = @transform_7, window_bounds = array<i64: 256, 32>}, {pipeline_mode = #tpu.pipeline_mode<synchronous>, transform_indices = @transform_8, window_bounds = array<i64: 1, 32>}, {transform_indices = @transform_9, window_bounds = array<i64: 1, 65, 32>}]} {
    %c0 = arith.constant 0 : index
    %c0_0 = arith.constant 0 : index
    %c0_1 = arith.constant 0 : index
    %0 = vector.load %arg1[%c0, %c0_0, %c0_1] : memref<1x64x128xbf16, #tpu.memory_space<vmem>>, vector<1x64x128xbf16>
    %1 = vector.shape_cast %0 : vector<1x64x128xbf16> to vector<64x128xbf16>
    %c0_2 = arith.constant 0 : index
    %c0_3 = arith.constant 0 : index
    %2 = vector.load %arg4[%c0_2, %c0_3] : memref<128x32xbf16, #tpu.memory_space<vmem>>, vector<128x32xbf16>
    %cst = arith.constant dense<0.000000e+00> : vector<64x32xf32>
    %3 = tpu.matmul %1, %2, %cst {dimension_numbers = #tpu.dot_dimension_numbers<[1], [0], [0], [1], [0, 0, 1, 1], [], []>} : vector<64x128xbf16>, vector<128x32xbf16>, vector<64x32xf32> -> vector<64x32xf32>
    %c0_4 = arith.constant 0 : index
    %c0_5 = arith.constant 0 : index
    %4 = vector.load %arg5[%c0_4, %c0_5] : memref<1x32xf32, #tpu.memory_space<vmem>>, vector<1x32xf32>
    %5 = vector.broadcast %4 : vector<1x32xf32> to vector<64x32xf32>
    %6 = arith.addf %3, %5 : vector<64x32xf32>
    %c0_6 = arith.constant 0 : index
    %c0_7 = arith.constant 0 : index
    %c0_8 = arith.constant 0 : index
    %7 = vector.load %arg2[%c0_6, %c0_7, %c0_8] : memref<1x64x1xf32, #tpu.memory_space<vmem>>, vector<1x64x1xf32>
    %8 = vector.shape_cast %7 : vector<1x64x1xf32> to vector<64x1xf32>
    %9 = vector.broadcast %8 : vector<64x1xf32> to vector<64x32xf32>
    %10 = arith.mulf %6, %9 : vector<64x32xf32>
    %c0_9 = arith.constant 0 : index
    %c0_10 = arith.constant 0 : index
    %c0_11 = arith.constant 0 : index
    %11 = vector.load %arg10[%c0_9, %c0_10, %c0_11] : memref<1x65x32xf32, #tpu.memory_space<vmem>>, vector<1x64x32xf32>
    %12 = vector.shape_cast %11 : vector<1x64x32xf32> to vector<64x32xf32>
    %13 = vector.shape_cast %10 : vector<64x32xf32> to vector<1x64x32xf32>
    tpu.vector_store %arg10[%c0_9, %c0_10, %c0_11], %13 {strides = array<i32>} : memref<1x65x32xf32, #tpu.memory_space<vmem>>, vector<1x64x32xf32>,
    %c0_12 = arith.constant 0 : index
    %c0_13 = arith.constant 0 : index
    %c0_14 = arith.constant 0 : index
    %14 = vector.load %arg3[%c0_12, %c0_13, %c0_14] : memref<1x1x1xf32, #tpu.memory_space<vmem>>, vector<1x1x1xf32>
    %15 = vector.shape_cast %14 : vector<1x1x1xf32> to vector<1x1xf32>
    %cst_15 = arith.constant 0.000000e+00 : f32
    %cst_16 = arith.constant 5.120000e+02 : f32
    %16 = vector.broadcast %cst_15 : f32 to vector<1x1xf32>
    %17 = arith.maximumf %16, %15 : vector<1x1xf32>
    %18 = vector.broadcast %cst_16 : f32 to vector<1x1xf32>
    %19 = arith.minimumf %18, %17 : vector<1x1xf32>
    %cst_17 = arith.constant 0.000000e+00 : f32
    %20 = vector.broadcast %cst_17 : f32 to vector<1x1xf32>
    %21 = arith.subf %19, %20 : vector<1x1xf32>
    %cst_18 = arith.constant 0.001953125 : f32
    %22 = vector.broadcast %cst_18 : f32 to vector<1x1xf32>
    %23 = arith.mulf %21, %22 : vector<1x1xf32>
    %c0_19 = arith.constant 0 : index
    %c0_20 = arith.constant 0 : index
    %24 = vector.load %arg6[%c0_19, %c0_20] : memref<1x128xf32, #tpu.memory_space<vmem>>, vector<1x128xf32>
    %25 = vector.broadcast %23 : vector<1x1xf32> to vector<1x128xf32>
    %26 = arith.mulf %25, %24 : vector<1x128xf32>
    %27 = math.sin %26 : vector<1x128xf32>
    %28 = math.cos %26 : vector<1x128xf32>
    %29 = tpu.concatenate %27, %28 in 1 : vector<1x128xf32>, vector<1x128xf32> -> vector<1x256xf32>
    %c0_21 = arith.constant 0 : index
    %c0_22 = arith.constant 0 : index
    %30 = vector.load %arg7[%c0_21, %c0_22] : memref<1x32xf32, #tpu.memory_space<vmem>>, vector<1x32xf32>
    %31 = vector.broadcast %23 : vector<1x1xf32> to vector<1x32xf32>
    %32 = arith.mulf %31, %30 : vector<1x32xf32>
    %c0_23 = arith.constant 0 : index
    %c0_24 = arith.constant 0 : index
    %33 = vector.load %arg9[%c0_23, %c0_24] : memref<1x32xf32, #tpu.memory_space<vmem>>, vector<1x32xf32>
    %34 = arith.addf %32, %33 : vector<1x32xf32>
    %c0_25 = arith.constant 0 : index
    %c0_26 = arith.constant 0 : index
    %35 = vector.load %arg8[%c0_25, %c0_26] : memref<256x32xf32, #tpu.memory_space<vmem>>, vector<256x32xf32>
    %cst_27 = arith.constant dense<0.000000e+00> : vector<1x32xf32>
    %36 = tpu.matmul %29, %35, %cst_27 {dimension_numbers = #tpu.dot_dimension_numbers<[1], [0], [0], [1], [0, 0, 1, 1], [], []>} : vector<1x256xf32>, vector<256x32xf32>, vector<1x32xf32> -> vector<1x32xf32>
    %37 = arith.addf %34, %36 : vector<1x32xf32>
    %c0_28 = arith.constant 0 : index
    %c64 = arith.constant 64 : index
    %c0_29 = arith.constant 0 : index
    %38 = vector.load %arg10[%c0_28, %c64, %c0_29] : memref<1x65x32xf32, #tpu.memory_space<vmem>>, vector<1x1x32xf32>
    %39 = vector.shape_cast %38 : vector<1x1x32xf32> to vector<1x32xf32>
    %40 = vector.shape_cast %37 : vector<1x32xf32> to vector<1x1x32xf32>
    tpu.vector_store %arg10[%c0_28, %c64, %c0_29], %40 {strides = array<i32>} : memref<1x65x32xf32, #tpu.memory_space<vmem>>, vector<1x1x32xf32>,
    return
  }
  func.func @transform_0(%arg0: i32) -> (i32, i32, i32) {
    %c0_i32 = arith.constant 0 : i32
    %c0_i32_0 = arith.constant 0 : i32
    %c0_i32_1 = arith.constant 0 : i32
    return %arg0, %c0_i32, %c0_i32_0 : i32, i32, i32
  }
  func.func @transform_1(%arg0: i32) -> (i32, i32, i32) {
    %c0_i32 = arith.constant 0 : i32
    %c0_i32_0 = arith.constant 0 : i32
    %c0_i32_1 = arith.constant 0 : i32
    return %arg0, %c0_i32, %c0_i32_0 : i32, i32, i32
  }
  func.func @transform_2(%arg0: i32) -> (i32, i32, i32) {
    %c0_i32 = arith.constant 0 : i32
    %c0_i32_0 = arith.constant 0 : i32
    %c0_i32_1 = arith.constant 0 : i32
    return %arg0, %c0_i32, %c0_i32_0 : i32, i32, i32
  }
  func.func @transform_3(%arg0: i32) -> (i32, i32) {
    %c0_i32 = arith.constant 0 : i32
    %c0_i32_0 = arith.constant 0 : i32
    %c0_i32_1 = arith.constant 0 : i32
    return %c0_i32, %c0_i32_0 : i32, i32
  }
  func.func @transform_4(%arg0: i32) -> (i32, i32) {
    %c0_i32 = arith.constant 0 : i32
    %c0_i32_0 = arith.constant 0 : i32
    %c0_i32_1 = arith.constant 0 : i32
    return %c0_i32, %c0_i32_0 : i32, i32
  }
  func.func @transform_5(%arg0: i32) -> (i32, i32) {
    %c0_i32 = arith.constant 0 : i32
    %c0_i32_0 = arith.constant 0 : i32
    %c0_i32_1 = arith.constant 0 : i32
    return %c0_i32, %c0_i32_0 : i32, i32
  }
  func.func @transform_6(%arg0: i32) -> (i32, i32) {
    %c0_i32 = arith.constant 0 : i32
    %c0_i32_0 = arith.constant 0 : i32
    %c0_i32_1 = arith.constant 0 : i32
    return %c0_i32, %c0_i32_0 : i32, i32
  }
  func.func @transform_7(%arg0: i32) -> (i32, i32) {
    %c0_i32 = arith.constant 0 : i32
    %c0_i32_0 = arith.constant 0 : i32
    %c0_i32_1 = arith.constant 0 : i32
    return %c0_i32, %c0_i32_0 : i32, i32
  }
  func.func @transform_8(%arg0: i32) -> (i32, i32) {
    %c0_i32 = arith.constant 0 : i32
    %c0_i32_0 = arith.constant 0 : i32
    %c0_i32_1 = arith.constant 0 : i32
    return %c0_i32, %c0_i32_0 : i32, i32
  }
  func.func @transform_9(%arg0: i32) -> (i32, i32, i32) {
    %c0_i32 = arith.constant 0 : i32
    %c0_i32_0 = arith.constant 0 : i32
    %c0_i32_1 = arith.constant 0 : i32
    return %arg0, %c0_i32, %c0_i32_0 : i32, i32, i32
  }
}

</mosaic_0001>

<llo_original>
// kernel: tpu_custom_call.1
$region0: #{tpu_custom_call.1}
  #allocation0 [shape = 'u32[]', space=smem, size = 0x4, offset = 0x4, fixed_abs, tag = 'smem constant byte address 0x4 - core index']
  #allocation1 [shape = 'u32[144,128]{1,0:T(1,128)}', space=vmem, size = 0x12000, scoped, tag = 'internal scratch']
  %s0 = inlined_call_operand.vmem [shape: bf16[2,64,128], index: 0, kind: input, shape index: {}]
  %s1 = inlined_call_operand.vmem [shape: f32[2,64,1], index: 1, kind: input, shape index: {}]
  %s2 = inlined_call_operand.vmem [shape: f32[2,1,1], index: 2, kind: input, shape index: {}]
  %s3 = inlined_call_operand.vmem [shape: bf16[128,32], index: 3, kind: input, shape index: {}]
  %s4 = inlined_call_operand.vmem [shape: f32[1,32], index: 4, kind: input, shape index: {}]
  %s5 = inlined_call_operand.vmem [shape: f32[1,128], index: 5, kind: input, shape index: {}]
  %s6 = inlined_call_operand.vmem [shape: f32[1,32], index: 6, kind: input, shape index: {}]
  %s7 = inlined_call_operand.vmem [shape: f32[256,32], index: 7, kind: input, shape index: {}]
  %s8 = inlined_call_operand.vmem [shape: f32[1,32], index: 8, kind: input, shape index: {}]
  %s9 = inlined_call_operand.vmem [shape: f32[2,65,32], index: 9, kind: output, shape index: {}]
  %s10 = sld [smem:[#allocation0]]
  $region69: #{tpu_custom_call.1} parent=0
    _
  %s12 = ssub.s32 1, %s10
  %s13 = scalar_select 0, %s12, %s10
  loop: start=0, step=1, limit=4
  $region2: #{tpu_custom_call.1} parent=0 // loop_pre_header
    _
  $region3: #{tpu_custom_call.1} parent=0 // loop_header
    %s15 = sphi 0, %s19
    %p16 = scmp.ge.s32.totalorder %s15, 4
    %s25 = sphi 0, %s27
    %s28 = sphi 0, %s25
    %s29 = sphi 0, %s28
    %s45 = sphi 0, %s29
    %s51 = sphi 0, %s53
    %s54 = sphi 0, %s51
    %s55 = sphi 0, %s54
    %s71 = sphi 0, %s55
    %s77 = sphi 0, %s79
    %s80 = sphi 0, %s77
    %s81 = sphi 0, %s80
    %s97 = sphi 0, %s81
    %s101 = sphi 0, %s101
    %s103 = sphi 0, %s101
    %s104 = sphi 0, %s103
    %s118 = sphi 0, %s104
    %s122 = sphi 0, %s122
    %s124 = sphi 0, %s122
    %s125 = sphi 0, %s124
    %s139 = sphi 0, %s125
    %s143 = sphi 0, %s143
    %s145 = sphi 0, %s143
    %s146 = sphi 0, %s145
    %s160 = sphi 0, %s146
    %s164 = sphi 0, %s164
    %s166 = sphi 0, %s164
    %s167 = sphi 0, %s166
    %s181 = sphi 0, %s167
    %s185 = sphi 0, %s185
    %s187 = sphi 0, %s185
    %s188 = sphi 0, %s187
    %s202 = sphi 0, %s188
    %s206 = sphi 0, %s206
    %s208 = sphi 0, %s206
    %s209 = sphi 0, %s208
    %s223 = sphi 0, %s209
    %s229 = sphi 0, %s231
    %s232 = sphi 0, %s229
    %s233 = sphi 0, %s232
    %s249 = sphi 0, %s233
  $region4: #{tpu_custom_call.1} parent=0 // loop_header_branch
    %18 = sbr.rel (%p16) target = $region8
  $region5: #{tpu_custom_call.1} parent=0 // loop_body
    %s20 = ssub.s32 %s15, 1
    %s21 = ssub.s32 %s15, 2
    %s22 = sadd.s32 %s15, 1
    %s23 = ssub.s32 %s15, %s22
    %p24 = scmp.eq.s32.totalorder %s23, 0
    %s26 = sadd.s32 %s25, 1
    %s27 = scalar_select %p24, %s25, %s26
    %p30 = pneg %p24
    %p31 = scmp.eq.s32.totalorder %s15, 1
    %p32 = por %p30, %p31
    %p33 = scmp.ne.s32.totalorder %s25, %s28
    %p34 = scmp.eq.s32.totalorder %s15, 0
    %p35 = por %p33, %p34
    %p36 = scmp.ne.s32.totalorder %s25, %s28
    %p37 = scmp.eq.s32.totalorder %s20, 1
    %p38 = por %p36, %p37
    %p39 = scmp.ne.s32.totalorder %s28, %s29
    %p40 = scmp.eq.s32.totalorder %s20, 0
    %p41 = por %p39, %p40
    %p42 = scmp.ne.s32.totalorder %s28, %s29
    %p43 = scmp.eq.s32.totalorder %s21, 1
    %p44 = por %p42, %p43
    %p46 = scmp.ne.s32.totalorder %s29, %s45
    %p47 = scmp.eq.s32.totalorder %s21, 0
    %p48 = por %p46, %p47
    %s49 = ssub.s32 %s15, %s22
    %p50 = scmp.eq.s32.totalorder %s49, 0
    %s52 = sadd.s32 %s51, 1
    %s53 = scalar_select %p50, %s51, %s52
    %p56 = pneg %p50
    %p57 = scmp.eq.s32.totalorder %s15, 1
    %p58 = por %p56, %p57
    %p59 = scmp.ne.s32.totalorder %s51, %s54
    %p60 = scmp.eq.s32.totalorder %s15, 0
    %p61 = por %p59, %p60
    %p62 = scmp.ne.s32.totalorder %s51, %s54
    %p63 = scmp.eq.s32.totalorder %s20, 1
    %p64 = por %p62, %p63
    %p65 = scmp.ne.s32.totalorder %s54, %s55
    %p66 = scmp.eq.s32.totalorder %s20, 0
    %p67 = por %p65, %p66
    %p68 = scmp.ne.s32.totalorder %s54, %s55
    %p69 = scmp.eq.s32.totalorder %s21, 1
    %p70 = por %p68, %p69
    %p72 = scmp.ne.s32.totalorder %s55, %s71
    %p73 = scmp.eq.s32.totalorder %s21, 0
    %p74 = por %p72, %p73
    %s75 = ssub.s32 %s15, %s22
    %p76 = scmp.eq.s32.totalorder %s75, 0
    %s78 = sadd.s32 %s77, 1
    %s79 = scalar_select %p76, %s77, %s78
    %p82 = pneg %p76
    %p83 = scmp.eq.s32.totalorder %s15, 1
    %p84 = por %p82, %p83
    %p85 = scmp.ne.s32.totalorder %s77, %s80
    %p86 = scmp.eq.s32.totalorder %s15, 0
    %p87 = por %p85, %p86
    %p88 = scmp.ne.s32.totalorder %s77, %s80
    %p89 = scmp.eq.s32.totalorder %s20, 1
    %p90 = por %p88, %p89
    %p91 = scmp.ne.s32.totalorder %s80, %s81
    %p92 = scmp.eq.s32.totalorder %s20, 0
    %p93 = por %p91, %p92
    %p94 = scmp.ne.s32.totalorder %s80, %s81
    %p95 = scmp.eq.s32.totalorder %s21, 1
    %p96 = por %p94, %p95
    %p98 = scmp.ne.s32.totalorder %s81, %s97
    %p99 = scmp.eq.s32.totalorder %s21, 0
    %p100 = por %p98, %p99
    %s102 = sadd.s32 %s101, 1
    %p105 = scmp.eq.s32.totalorder %s15, 1
    %p106 = scmp.ne.s32.totalorder %s101, %s103
    %p107 = scmp.eq.s32.totalorder %s15, 0
    %p108 = por %p106, %p107
    %p109 = scmp.ne.s32.totalorder %s101, %s103
    %p110 = scmp.eq.s32.totalorder %s20, 1
    %p111 = por %p109, %p110
    %p112 = scmp.ne.s32.totalorder %s103, %s104
    %p113 = scmp.eq.s32.totalorder %s20, 0
    %p114 = por %p112, %p113
    %p115 = scmp.ne.s32.totalorder %s103, %s104
    %p116 = scmp.eq.s32.totalorder %s21, 1
    %p117 = por %p115, %p116
    %p119 = scmp.ne.s32.totalorder %s104, %s118
    %p120 = scmp.eq.s32.totalorder %s21, 0
    %p121 = por %p119, %p120
    %s123 = sadd.s32 %s122, 1
    %p126 = scmp.eq.s32.totalorder %s15, 1
    %p127 = scmp.ne.s32.totalorder %s122, %s124
    %p128 = scmp.eq.s32.totalorder %s15, 0
    %p129 = por %p127, %p128
    %p130 = scmp.ne.s32.totalorder %s122, %s124
    %p131 = scmp.eq.s32.totalorder %s20, 1
    %p132 = por %p130, %p131
    %p133 = scmp.ne.s32.totalorder %s124, %s125
    %p134 = scmp.eq.s32.totalorder %s20, 0
    %p135 = por %p133, %p134
    %p136 = scmp.ne.s32.totalorder %s124, %s125
    %p137 = scmp.eq.s32.totalorder %s21, 1
    %p138 = por %p136, %p137
    %p140 = scmp.ne.s32.totalorder %s125, %s139
    %p141 = scmp.eq.s32.totalorder %s21, 0
    %p142 = por %p140, %p141
    %s144 = sadd.s32 %s143, 1
    %p147 = scmp.eq.s32.totalorder %s15, 1
    %p148 = scmp.ne.s32.totalorder %s143, %s145
    %p149 = scmp.eq.s32.totalorder %s15, 0
    %p150 = por %p148, %p149
    %p151 = scmp.ne.s32.totalorder %s143, %s145
    %p152 = scmp.eq.s32.totalorder %s20, 1
    %p153 = por %p151, %p152
    %p154 = scmp.ne.s32.totalorder %s145, %s146
    %p155 = scmp.eq.s32.totalorder %s20, 0
    %p156 = por %p154, %p155
    %p157 = scmp.ne.s32.totalorder %s145, %s146
    %p158 = scmp.eq.s32.totalorder %s21, 1
    %p159 = por %p157, %p158
    %p161 = scmp.ne.s32.totalorder %s146, %s160
    %p162 = scmp.eq.s32.totalorder %s21, 0
    %p163 = por %p161, %p162
    %s165 = sadd.s32 %s164, 1
    %p168 = scmp.eq.s32.totalorder %s15, 1
    %p169 = scmp.ne.s32.totalorder %s164, %s166
    %p170 = scmp.eq.s32.totalorder %s15, 0
    %p171 = por %p169, %p170
    %p172 = scmp.ne.s32.totalorder %s164, %s166
    %p173 = scmp.eq.s32.totalorder %s20, 1
    %p174 = por %p172, %p173
    %p175 = scmp.ne.s32.totalorder %s166, %s167
    %p176 = scmp.eq.s32.totalorder %s20, 0
    %p177 = por %p175, %p176
    %p178 = scmp.ne.s32.totalorder %s166, %s167
    %p179 = scmp.eq.s32.totalorder %s21, 1
    %p180 = por %p178, %p179
    %p182 = scmp.ne.s32.totalorder %s167, %s181
    %p183 = scmp.eq.s32.totalorder %s21, 0
    %p184 = por %p182, %p183
    %s186 = sadd.s32 %s185, 1
    %p189 = scmp.eq.s32.totalorder %s15, 1
    %p190 = scmp.ne.s32.totalorder %s185, %s187
    %p191 = scmp.eq.s32.totalorder %s15, 0
    %p192 = por %p190, %p191
    %p193 = scmp.ne.s32.totalorder %s185, %s187
    %p194 = scmp.eq.s32.totalorder %s20, 1
    %p195 = por %p193, %p194
    %p196 = scmp.ne.s32.totalorder %s187, %s188
    %p197 = scmp.eq.s32.totalorder %s20, 0
    %p198 = por %p196, %p197
    %p199 = scmp.ne.s32.totalorder %s187, %s188
    %p200 = scmp.eq.s32.totalorder %s21, 1
    %p201 = por %p199, %p200
    %p203 = scmp.ne.s32.totalorder %s188, %s202
    %p204 = scmp.eq.s32.totalorder %s21, 0
    %p205 = por %p203, %p204
    %s207 = sadd.s32 %s206, 1
    %p210 = scmp.eq.s32.totalorder %s15, 1
    %p211 = scmp.ne.s32.totalorder %s206, %s208
    %p212 = scmp.eq.s32.totalorder %s15, 0
    %p213 = por %p211, %p212
    %p214 = scmp.ne.s32.totalorder %s206, %s208
    %p215 = scmp.eq.s32.totalorder %s20, 1
    %p216 = por %p214, %p215
    %p217 = scmp.ne.s32.totalorder %s208, %s209
    %p218 = scmp.eq.s32.totalorder %s20, 0
    %p219 = por %p217, %p218
    %p220 = scmp.ne.s32.totalorder %s208, %s209
    %p221 = scmp.eq.s32.totalorder %s21, 1
    %p222 = por %p220, %p221
    %p224 = scmp.ne.s32.totalorder %s209, %s223
    %p225 = scmp.eq.s32.totalorder %s21, 0
    %p226 = por %p224, %p225
    %s227 = ssub.s32 %s15, %s22
    %p228 = scmp.eq.s32.totalorder %s227, 0
    %s230 = sadd.s32 %s229, 1
    %s231 = scalar_select %p228, %s229, %s230
    %p234 = pneg %p228
    %p235 = scmp.eq.s32.totalorder %s15, 1
    %p236 = por %p234, %p235
    %p237 = scmp.ne.s32.totalorder %s229, %s232
    %p238 = scmp.eq.s32.totalorder %s15, 0
    %p239 = por %p237, %p238
    %p240 = scmp.ne.s32.totalorder %s229, %s232
    %p241 = scmp.eq.s32.totalorder %s20, 1
    %p242 = por %p240, %p241
    %p243 = scmp.ne.s32.totalorder %s232, %s233
    %p244 = scmp.eq.s32.totalorder %s20, 0
    %p245 = por %p243, %p244
    %p246 = scmp.ne.s32.totalorder %s232, %s233
    %p247 = scmp.eq.s32.totalorder %s21, 1
    %p248 = por %p246, %p247
    %p250 = scmp.ne.s32.totalorder %s233, %s249
    %p251 = scmp.eq.s32.totalorder %s21, 0
    %p252 = por %p250, %p251
    %p253 = scmp.le.s32.totalorder 1, %s15
    %p254 = scmp.lt.s32.totalorder %s15, 3
    %p255 = pnand %p253, %p254
    %p256 = pneg %p255
    // Predicated region
    $region9: #{tpu_custom_call.1} parent=5 // pred_check
      _
    $region10: #{tpu_custom_call.1} parent=5 // pred_check_branch
      %258 = sbr.rel (%p255) target = $region12
    $region11: #{tpu_custom_call.1} parent=5 // pred_region
      %s259 = ssub.s32 %s15, 1
      // Predicated region
      $region13: #{tpu_custom_call.1} parent=11 // pred_check
        %p260 = pneg %p114
      $region14: #{tpu_custom_call.1} parent=11 // pred_check_branch
        %262 = sbr.rel (%p260) target = $region16
      $region15: #{tpu_custom_call.1} parent=11 // pred_region
        _
      $region16: #{tpu_custom_call.1} parent=11 // pred_fallthru
        _
      // Predicated region
      $region17: #{tpu_custom_call.1} parent=11 // pred_check
        %p263 = pneg %p135
      $region18: #{tpu_custom_call.1} parent=11 // pred_check_branch
        %265 = sbr.rel (%p263) target = $region20
      $region19: #{tpu_custom_call.1} parent=11 // pred_region
        _
      $region20: #{tpu_custom_call.1} parent=11 // pred_fallthru
        _
      // Predicated region
      $region21: #{tpu_custom_call.1} parent=11 // pred_check
        %p266 = pneg %p156
      $region22: #{tpu_custom_call.1} parent=11 // pred_check_branch
        %268 = sbr.rel (%p266) target = $region24
      $region23: #{tpu_custom_call.1} parent=11 // pred_region
        _
      $region24: #{tpu_custom_call.1} parent=11 // pred_fallthru
        _
      // Predicated region
      $region25: #{tpu_custom_call.1} parent=11 // pred_check
        %p269 = pneg %p177
      $region26: #{tpu_custom_call.1} parent=11 // pred_check_branch
        %271 = sbr.rel (%p269) target = $region28
      $region27: #{tpu_custom_call.1} parent=11 // pred_region
        _
      $region28: #{tpu_custom_call.1} parent=11 // pred_fallthru
        _
      // Predicated region
      $region29: #{tpu_custom_call.1} parent=11 // pred_check
        %p272 = pneg %p198
      $region30: #{tpu_custom_call.1} parent=11 // pred_check_branch
        %274 = sbr.rel (%p272) target = $region32
      $region31: #{tpu_custom_call.1} parent=11 // pred_region
        _
      $region32: #{tpu_custom_call.1} parent=11 // pred_fallthru
        _
      // Predicated region
      $region33: #{tpu_custom_call.1} parent=11 // pred_check
        %p275 = pneg %p219
      $region34: #{tpu_custom_call.1} parent=11 // pred_check_branch
        %277 = sbr.rel (%p275) target = $region36
      $region35: #{tpu_custom_call.1} parent=11 // pred_region
        _
      $region36: #{tpu_custom_call.1} parent=11 // pred_fallthru
        _
    $region12: #{tpu_custom_call.1} parent=5 // pred_fallthru
      _
    %p278 = scmp.lt.s32.totalorder %s15, 2
    // Predicated region
    $region37: #{tpu_custom_call.1} parent=5 // pred_check
      %p279 = pneg %p278
    $region38: #{tpu_custom_call.1} parent=5 // pred_check_branch
      %281 = sbr.rel (%p279) target = $region40
    $region39: #{tpu_custom_call.1} parent=5 // pred_region
      // Predicated region
      $region41: #{tpu_custom_call.1} parent=39 // pred_check
        %p282 = pneg %p35
      $region42: #{tpu_custom_call.1} parent=39 // pred_check_branch
        %284 = sbr.rel (%p282) target = $region44
      $region43: #{tpu_custom_call.1} parent=39 // pred_region
        %p285 = scmp.lt.s32.totalorder %s15, 1
        %s286 = scalar_select %p285, %s15, 1
        %s287 = smul.addr %s286, 8
        %s288 = smul.addr %s287, 4
        %s289 = scalar_lea.vmem %s0, %s288
      $region44: #{tpu_custom_call.1} parent=39 // pred_fallthru
        _
      // Predicated region
      $region45: #{tpu_custom_call.1} parent=39 // pred_check
        %p290 = pneg %p61
      $region46: #{tpu_custom_call.1} parent=39 // pred_check_branch
        %292 = sbr.rel (%p290) target = $region48
      $region47: #{tpu_custom_call.1} parent=39 // pred_region
        %p293 = scmp.lt.s32.totalorder %s15, 1
        %s294 = scalar_select %p293, %s15, 1
        %s295 = smul.addr %s294, 8
        %s296 = smul.addr %s295, 8
        %s297 = scalar_lea.vmem %s1, %s296
      $region48: #{tpu_custom_call.1} parent=39 // pred_fallthru
        _
      // Predicated region
      $region49: #{tpu_custom_call.1} parent=39 // pred_check
        %p298 = pneg %p87
      $region50: #{tpu_custom_call.1} parent=39 // pred_check_branch
        %300 = sbr.rel (%p298) target = $region52
      $region51: #{tpu_custom_call.1} parent=39 // pred_region
        %p301 = scmp.lt.s32.totalorder %s15, 1
        %s302 = scalar_select %p301, %s15, 1
        %s303 = scalar_lea.vmem %s2, %s302
      $region52: #{tpu_custom_call.1} parent=39 // pred_fallthru
        _
    $region40: #{tpu_custom_call.1} parent=5 // pred_fallthru
      _
    %p304 = scmp.le.s32.totalorder 1, %s15
    %p305 = scmp.lt.s32.totalorder %s15, 3
    %p306 = pnand %p304, %p305
    %p307 = pneg %p306
    // Predicated region
    $region53: #{tpu_custom_call.1} parent=5 // pred_check
      _
    $region54: #{tpu_custom_call.1} parent=5 // pred_check_branch
      %309 = sbr.rel (%p306) target = $region56
    $region55: #{tpu_custom_call.1} parent=5 // pred_region
      %s310 = ssub.s32 %s15, 1
      %p311 = scmp.lt.s32.totalorder %s20, 1
      %s312 = scalar_select %p311, %s20, 1
      %s313 = smul.addr %s312, 8
      %s314 = smul.addr %s313, 4
      %s315 = scalar_lea.vmem %s0, %s314
      %p316 = pneg %p41
      %p317 = pneg %p38
      %p318 = scmp.lt.s32.totalorder %s20, 1
      %s319 = scalar_select %p318, %s20, 1
      %s320 = smul.addr %s319, 8
      %s321 = smul.addr %s320, 8
      %s322 = scalar_lea.vmem %s1, %s321
      %p323 = pneg %p67
      %p324 = pneg %p64
      %p325 = scmp.lt.s32.totalorder %s20, 1
      %s326 = scalar_select %p325, %s20, 1
      %s327 = scalar_lea.vmem %s2, %s326
      %p328 = pneg %p93
      %p329 = pneg %p90
      %p330 = pneg %p114
      %p331 = pneg %p111
      %p332 = pneg %p135
      %p333 = pneg %p132
      %p334 = pneg %p156
      %p335 = pneg %p153
      %p336 = pneg %p177
      %p337 = pneg %p174
      %p338 = pneg %p198
      %p339 = pneg %p195
      %p340 = pneg %p219
      %p341 = pneg %p216
      %p342 = pneg %p245
      %p343 = pneg %p242
      %p344 = scmp.lt.s32.totalorder %s20, 1
      %s345 = scalar_select %p344, %s20, 1
      %s346 = smul.addr %s345, 9
      %s347 = smul.addr %s346, 8
      %s348 = scalar_lea.vmem %s9, %s347
      %p349 = scmp.lt.s32.totalorder %s20, 1
      %s350 = scalar_select %p349, %s20, 1
      %s351 = smul.addr %s350, 8
      %s352 = smul.addr %s351, 4
      %s353 = scalar_lea.vmem %s0, %s352
      %p354 = scmp.lt.s32.totalorder %s20, 1
      %s355 = scalar_select %p354, %s20, 1
      %s356 = smul.addr %s355, 8
      %s357 = smul.addr %s356, 8
      %s358 = scalar_lea.vmem %s1, %s357
      %p359 = scmp.lt.s32.totalorder %s20, 1
      %s360 = scalar_select %p359, %s20, 1
      %s361 = scalar_lea.vmem %s2, %s360
      %p362 = scmp.lt.s32.totalorder %s20, 1
      %s363 = scalar_select %p362, %s20, 1
      %s364 = smul.addr %s363, 9
      %s365 = smul.addr %s364, 8
      %s366 = scalar_lea.vmem %s9, %s365
      %v368 = vld [vmem:[%s353] sm:$0xf]
      %v369 = vld [vmem:[%s353 + $0x4] sm:$0xf]
      %v370 = vld [vmem:[%s353 + $0x8] sm:$0xf]
      %v371 = vld [vmem:[%s353 + $0xc] sm:$0xf]
      %v372 = vld [vmem:[%s353 + $0x10] sm:$0xf]
      %v373 = vld [vmem:[%s353 + $0x14] sm:$0xf]
      %v374 = vld [vmem:[%s353 + $0x18] sm:$0xf]
      %v375 = vld [vmem:[%s353 + $0x1c] sm:$0xf]
      %v376 = vld [vmem:[%s3] sm:$0xf]
      %v377 = vld [vmem:[%s3 + $0x4] sm:$0xf]
      %v378 = vld [vmem:[%s3 + $0x8] sm:$0xf]
      %v379 = vld [vmem:[%s3 + $0xc] sm:$0xf]
      %v380 = vld [vmem:[%s3 + $0x10] sm:$0xf]
      %v381 = vld [vmem:[%s3 + $0x14] sm:$0xf]
      %v382 = vld [vmem:[%s3 + $0x18] sm:$0xf]
      %v383 = vld [vmem:[%s3 + $0x1c] sm:$0xf]
      %v384 = vld [vmem:[%s3 + $0x20] sm:$0xf]
      %v385 = vld [vmem:[%s3 + $0x24] sm:$0xf]
      %v386 = vld [vmem:[%s3 + $0x28] sm:$0xf]
      %v387 = vld [vmem:[%s3 + $0x2c] sm:$0xf]
      %v388 = vld [vmem:[%s3 + $0x30] sm:$0xf]
      %v389 = vld [vmem:[%s3 + $0x34] sm:$0xf]
      %v390 = vld [vmem:[%s3 + $0x38] sm:$0xf]
      %v391 = vld [vmem:[%s3 + $0x3c] sm:$0xf]
      %v392 = vld [vmem:[%s4] sm:$0x1]
      %v394 = vlaneseq
      %v395 = vshrl.u32 %v394, 7
      %v396 = vsub.s32 0, %v395
      %v397 = vrot.slane %v392, %v396
      %v407 = vunpack.c.l.b16 %v368
      %v408 = vunpack.c.l.b16 %v369
      %v409 = vunpack.c.l.b16 %v370
      %v410 = vunpack.c.l.b16 %v371
      %v411 = vunpack.c.l.b16 %v372
      %v412 = vunpack.c.l.b16 %v373
      %v413 = vunpack.c.l.b16 %v374
      %v414 = vunpack.c.l.b16 %v375
      %v415 = vpack.c.b16 %v408, %v407
      %v416 = vpack.c.b16 %v410, %v409
      %v417 = vpack.c.b16 %v412, %v411
      %v418 = vpack.c.b16 %v414, %v413
      %v439 = vunpack.c.l.b16 %v376
      %v440 = vunpack.c.l.b16 %v377
      %v441 = vunpack.c.l.b16 %v378
      %v442 = vunpack.c.l.b16 %v379
      %v443 = vunpack.c.l.b16 %v380
      %v444 = vunpack.c.l.b16 %v381
      %v445 = vunpack.c.l.b16 %v382
      %v446 = vunpack.c.l.b16 %v383
      %v447 = vunpack.c.l.b16 %v384
      %v448 = vunpack.c.l.b16 %v385
      %v449 = vunpack.c.l.b16 %v386
      %v450 = vunpack.c.l.b16 %v387
      %v451 = vunpack.c.l.b16 %v388
      %v452 = vunpack.c.l.b16 %v389
      %v453 = vunpack.c.l.b16 %v390
      %v454 = vunpack.c.l.b16 %v391
      %v455 = vpack.c.b16 %v440, %v439
      %v456 = vpack.c.b16 %v442, %v441
      %v457 = vpack.c.b16 %v444, %v443
      %v458 = vpack.c.b16 %v446, %v445
      %v459 = vpack.c.b16 %v448, %v447
      %v460 = vpack.c.b16 %v450, %v449
      %v461 = vpack.c.b16 %v452, %v451
      %v462 = vpack.c.b16 %v454, %v453
      %471 = vmatprep.subr.bf16.mxu0 0
      %472 = vmatpush1.bf16.msra.mxu0 %v455
      %473 = vmatprep.subr.bf16.mxu0 0
      %474 = vmatpush1.bf16.msra.mxu0 %v456
      %475 = vmatprep.subr.bf16.mxu0 0
      %476 = vmatpush1.bf16.msra.mxu0 %v457
      %477 = vmatprep.subr.bf16.mxu0 0
      %478 = vmatpush1.bf16.msra.mxu0 %v458
      %479 = vmatprep.subr.bf16.mxu0 0
      %480 = vmatpush1.bf16.msra.mxu0 %v459
      %481 = vmatprep.subr.bf16.mxu0 0
      %482 = vmatpush1.bf16.msra.mxu0 %v460
      %483 = vmatprep.subr.bf16.mxu0 0
      %484 = vmatpush1.bf16.msra.mxu0 %v461
      %485 = vmatprep.subr.bf16.mxu0 0
      %486 = vmatpush1.bf16.msra.mxu0 %v462
      %487 = vmatprep.subr.bf16.mxu0 0
      %488 = vmatpush1.bf16.msra.mxu0 0
      %489 = vmatprep.subr.bf16.mxu0 0
      %490 = vmatpush1.bf16.msra.mxu0 0
      %491 = vmatprep.subr.bf16.mxu0 0
      %492 = vmatpush1.bf16.msra.mxu0 0
      %493 = vmatprep.subr.bf16.mxu0 0
      %494 = vmatpush1.bf16.msra.mxu0 0
      %495 = vmatprep.subr.bf16.mxu0 0
      %496 = vmatpush1.bf16.msra.mxu0 0
      %497 = vmatprep.subr.bf16.mxu0 0
      %498 = vmatpush1.bf16.msra.mxu0 0
      %499 = vmatprep.subr.bf16.mxu0 0
      %500 = vmatpush1.bf16.msra.mxu0 0
      %501 = vmatprep.subr.bf16.mxu0 0
      %502 = vmatpush1.bf16.msra.mxu0 0
      %503 = vmatprep.mubr.bf16.mxu0 0
      %504 = vmatmul.mubr.bf16.gmra.mrb[0].mxu0 %v415
      %v505 = vpop.f32.mrb[0].mxu0
      %v506 = vadd.f32 %v397, %v505
      %v507 = vpop.f32.mrb[0].mxu0
      %v508 = vpop.f32.mrb[0].mxu0
      %v509 = vadd.f32 %v397, %v508
      %v510 = vpop.f32.mrb[0].mxu0
      %511 = vmatprep.mubr.bf16.mxu0 0
      %512 = vmatmul.mubr.bf16.gmra.mrb[0].mxu0 %v416
      %v513 = vpop.f32.mrb[0].mxu0
      %v514 = vadd.f32 %v397, %v513
      %v515 = vpop.f32.mrb[0].mxu0
      %v516 = vpop.f32.mrb[0].mxu0
      %v517 = vadd.f32 %v397, %v516
      %v518 = vpop.f32.mrb[0].mxu0
      %519 = vmatprep.mubr.bf16.mxu0 0
      %520 = vmatmul.mubr.bf16.gmra.mrb[0].mxu0 %v417
      %v521 = vpop.f32.mrb[0].mxu0
      %v522 = vadd.f32 %v397, %v521
      %v523 = vpop.f32.mrb[0].mxu0
      %v524 = vpop.f32.mrb[0].mxu0
      %v525 = vadd.f32 %v397, %v524
      %v526 = vpop.f32.mrb[0].mxu0
      %527 = vmatprep.mubr.bf16.mxu0 0
      %528 = vmatmul.mubr.bf16.gmra.mrb[0].mxu0 %v418
      %v529 = vpop.f32.mrb[0].mxu0
      %v530 = vadd.f32 %v397, %v529
      %v531 = vpop.f32.mrb[0].mxu0
      %v532 = vpop.f32.mrb[0].mxu0
      %v533 = vadd.f32 %v397, %v532
      %v534 = vpop.f32.mrb[0].mxu0
      %535 = vdwg.mxu0
      %v536 = vld [vmem:[%s358] sm:$0xff]
      %v537 = vld [vmem:[%s358 + $0x8] sm:$0xff]
      %v538 = vld [vmem:[%s358 + $0x10] sm:$0xff]
      %v539 = vld [vmem:[%s358 + $0x18] sm:$0xff]
      %v540 = vld [vmem:[%s358 + $0x20] sm:$0xff]
      %v541 = vld [vmem:[%s358 + $0x28] sm:$0xff]
      %v542 = vld [vmem:[%s358 + $0x30] sm:$0xff]
      %v543 = vld [vmem:[%s358 + $0x38] sm:$0xff]
      %545 = vset.pattern.permute.xlu0 0
      %546 = vperm.xlu0 %545, %v536
      %v547 = vpop.permute.xlu0 %546
      %550 = vset.pattern.permute.xlu0 0
      %551 = vperm.xlu0 %550, %v537
      %v552 = vpop.permute.xlu0 %551
      %555 = vset.pattern.permute.xlu0 0
      %556 = vperm.xlu0 %555, %v538
      %v557 = vpop.permute.xlu0 %556
      %560 = vset.pattern.permute.xlu0 0
      %561 = vperm.xlu0 %560, %v539
      %v562 = vpop.permute.xlu0 %561
      %565 = vset.pattern.permute.xlu0 0
      %566 = vperm.xlu0 %565, %v540
      %v567 = vpop.permute.xlu0 %566
      %570 = vset.pattern.permute.xlu0 0
      %571 = vperm.xlu0 %570, %v541
      %v572 = vpop.permute.xlu0 %571
      %575 = vset.pattern.permute.xlu0 0
      %576 = vperm.xlu0 %575, %v542
      %v577 = vpop.permute.xlu0 %576
      %580 = vset.pattern.permute.xlu0 0
      %581 = vperm.xlu0 %580, %v543
      %v582 = vpop.permute.xlu0 %581
      %v584 = vmul.f32 %v506, %v547
      %v585 = vmul.f32 %v509, %v552
      %v586 = vmul.f32 %v514, %v557
      %v587 = vmul.f32 %v517, %v562
      %v588 = vmul.f32 %v522, %v567
      %v589 = vmul.f32 %v525, %v572
      %v590 = vmul.f32 %v530, %v577
      %v591 = vmul.f32 %v533, %v582
      %vm592 = vcmask 261120
      %593 = vst.msk [vmem:[%s366] sm:$0xff] %vm592, %v584
      %594 = vst.msk [vmem:[%s366 + $0x8] sm:$0xff] %vm592, %v585
      %595 = vst.msk [vmem:[%s366 + $0x10] sm:$0xff] %vm592, %v586
      %596 = vst.msk [vmem:[%s366 + $0x18] sm:$0xff] %vm592, %v587
      %597 = vst.msk [vmem:[%s366 + $0x20] sm:$0xff] %vm592, %v588
      %598 = vst.msk [vmem:[%s366 + $0x28] sm:$0xff] %vm592, %v589
      %599 = vst.msk [vmem:[%s366 + $0x30] sm:$0xff] %vm592, %v590
      %600 = vst.msk [vmem:[%s366 + $0x38] sm:$0xff] %vm592, %v591
      %v601 = vld [vmem:[%s361] sm:$0x1]
      %v602 = vmax.f32 %v601, 0.0
      %v603 = vmin.f32 %v602, 512.0
      %v604 = vmul.f32 %v603, 0.001953125
      %v605 = vld [vmem:[%s5] sm:$0x1]
      %607 = vset.pattern.permute.xlu0 0
      %608 = vperm.xlu0 %607, %v604
      %v609 = vpop.permute.xlu0 %608
      %v611 = vlaneseq
      %v612 = vshrl.u32 %v611, 7
      %v613 = vsub.s32 0, %v612
      %v614 = vrot.slane %v609, %v613
      %v615 = vmul.f32 %v614, %v605
      %v616 = vand.u32 2147483647, %v615
      %vm617 = vcmp.le.f32.partialorder %v616, 0.7853982
      %vm618 = vcmp.lt.s32.totalorder %v615, 0
      %v619 = vand.u32 %v615, 2139095040
      %v620 = vshrl.u32 %v619, 23
      %v621 = vsub.s32 %v620, 127
      %v622 = vand.u32 2147483647, %v615
      %v623 = vand.u32 %v622, 8388607
      %v624 = vor.u32 %v623, 8388608
      %v625 = vsub.s32 0, %v624
      %v626 = vadd.s32 %v621, 1
      %vm627 = vcmp.gt.s32.totalorder %v626, 0
      %v628 = vsel %vm627, %v626, 0
      %v629 = vshrl.u32 %v628, 5
      %v630 = vand.u32 %v628, 31
      %v631 = vsub.s32 32, %v630
      %v632 = vshrl.u32 683565275, %v631
      %v633 = vshll.u32 683565275, %v630
      %v634 = vshrl.u32 2475754826, %v631
      %v635 = vor.u32 %v633, %v634
      %v636 = vshll.u32 2475754826, %v630
      %v637 = vshrl.u32 2131351028, %v631
      %v638 = vor.u32 %v636, %v637
      %v639 = vshll.u32 2131351028, %v630
      %v640 = vshrl.u32 2102212464, %v631
      %v641 = vor.u32 %v639, %v640
      %v642 = vshll.u32 2102212464, %v630
      %v643 = vshrl.u32 920167782, %v631
      %v644 = vor.u32 %v642, %v643
      %v645 = vshll.u32 920167782, %v630
      %v646 = vshrl.u32 1326507024, %v631
      %v647 = vor.u32 %v645, %v646
      %vm648 = vcmp.lt.s32.totalorder %v629, 1
      %vm649 = vcmp.lt.s32.totalorder %v629, 2
      %vm650 = vcmp.lt.s32.totalorder %v629, 3
      %vm651 = vcmp.lt.s32.totalorder %v629, 4
      %v652 = vsel %vm648, %v632, %v635
      %v653 = vsel %vm651, %v641, 2102212464
      %v654 = vsel %vm650, %v638, %v653
      %v655 = vsel %vm649, %v652, %v654
      %v656 = vsel %vm648, %v635, %v638
      %v657 = vsel %vm651, %v644, 920167782
      %v658 = vsel %vm650, %v641, %v657
      %v659 = vsel %vm649, %v656, %v658
      %v660 = vsel %vm648, %v638, %v641
      %v661 = vsel %vm651, %v647, 1326507024
      %v662 = vsel %vm650, %v644, %v661
      %v663 = vsel %vm649, %v660, %v662
      %v664 = vshll.u32 %v624, 8
      %v665 = vmul.u32.u64.compose %v664, %v663
      %v666 = vextract.low.u32 %v665
      %v667 = vextract.high.u32 %v665
      %v668 = vmul.u32.u64.compose %v664, %v659
      %v669 = vextract.low.u32 %v668
      %v670 = vextract.high.u32 %v668
      %v671 = vmul.u32 %v664, %v655
      %v672 = vadd.s32 %v667, %v669
      %vm673 = vc.u32 %v667, %v669
      %v674 = vadd.s32 %v670, 1
      %v675 = vsel %vm673, %v674, %v670
      %v676 = vadd.s32 %v671, %v675
      %v677 = vadd.s32 %v676, 536870912
      %v678 = vshrl.u32 %v677, 30
      %v679 = vshll.u32 %v678, 30
      %v680 = vsub.s32 %v676, %v679
      %vm681 = vcmp.lt.s32.totalorder %v680, 0
      %v682 = vsub.s32 0, %v680
      %v683 = vsel %vm681, %v682, %v680
      %v684 = vclz %v683
      %v685 = vsub.s32 %v684, 2
      %vm686 = vcmp.gt.s32.totalorder 0, %v685
      %v687 = vsel %vm686, 0, %v685
      %v688 = vsub.s32 32, %v687
      %v689 = vshll.u32 %v680, %v687
      %v690 = vshrl.u32 %v672, %v688
      %v691 = vor.u32 %v689, %v690
      %v692 = vsub.s32 4294967266, %v687
      %v693 = vadd.s32 %v692, 127
      %v694 = vshll.u32 %v693, 23
      %v695 = vor.u32 4788187, %v694
      %v696 = vand.u32 2147483647, %v695
      %v698 = vcvt.s32.f32 %v691
      %v699 = vmul.f32 %v698, %v696
      %v700 = vxor.u32 %v699, 2147483648
      %v701 = vsel %vm618, %v700, %v699
      %v702 = vsub.s32 4, %v678
      %v703 = vsel %vm618, %v702, %v678
      %v704 = vsel %vm617, %v615, %v701
      %v705 = vsel %vm617, 0, %v703
      %v706 = vcosq.f32.pop %v704
      %v707 = vsinq.f32.pop %v704
      %vm708 = vweird.f32 %v615
      %v709 = vadd.s32 %v705, 3
      %v710 = vand.u32 %v709, 3
      %vm711 = vcmp.lt.s32.totalorder %v710, 2
      %vm712 = vcmp.eq.s32.totalorder %v710, 0
      %v713 = vxor.u32 %v707, 2147483648
      %v714 = vsel %vm712, %v706, %v713
      %vm715 = vcmp.eq.s32.totalorder %v710, 2
      %v716 = vxor.u32 %v706, 2147483648
      %v717 = vsel %vm715, %v716, %v707
      %v718 = vsel %vm711, %v714, %v717
      %v719 = vsel %vm708, nan, %v718
      %v720 = vand.u32 2147483647, %v615
      %vm721 = vcmp.le.f32.partialorder %v720, 0.7853982
      %vm722 = vcmp.lt.s32.totalorder %v615, 0
      %v723 = vand.u32 %v615, 2139095040
      %v724 = vshrl.u32 %v723, 23
      %v725 = vsub.s32 %v724, 127
      %v726 = vand.u32 2147483647, %v615
      %v727 = vand.u32 %v726, 8388607
      %v728 = vor.u32 %v727, 8388608
      %v729 = vsub.s32 0, %v728
      %v730 = vadd.s32 %v725, 1
      %vm731 = vcmp.gt.s32.totalorder %v730, 0
      %v732 = vsel %vm731, %v730, 0
      %v733 = vshrl.u32 %v732, 5
      %v734 = vand.u32 %v732, 31
      %v735 = vsub.s32 32, %v734
      %v736 = vshrl.u32 683565275, %v735
      %v737 = vshll.u32 683565275, %v734
      %v738 = vshrl.u32 2475754826, %v735
      %v739 = vor.u32 %v737, %v738
      %v740 = vshll.u32 2475754826, %v734
      %v741 = vshrl.u32 2131351028, %v735
      %v742 = vor.u32 %v740, %v741
      %v743 = vshll.u32 2131351028, %v734
      %v744 = vshrl.u32 2102212464, %v735
      %v745 = vor.u32 %v743, %v744
      %v746 = vshll.u32 2102212464, %v734
      %v747 = vshrl.u32 920167782, %v735
      %v748 = vor.u32 %v746, %v747
      %v749 = vshll.u32 920167782, %v734
      %v750 = vshrl.u32 1326507024, %v735
      %v751 = vor.u32 %v749, %v750
      %vm752 = vcmp.lt.s32.totalorder %v733, 1
      %vm753 = vcmp.lt.s32.totalorder %v733, 2
      %vm754 = vcmp.lt.s32.totalorder %v733, 3
      %vm755 = vcmp.lt.s32.totalorder %v733, 4
      %v756 = vsel %vm752, %v736, %v739
      %v757 = vsel %vm755, %v745, 2102212464
      %v758 = vsel %vm754, %v742, %v757
      %v759 = vsel %vm753, %v756, %v758
      %v760 = vsel %vm752, %v739, %v742
      %v761 = vsel %vm755, %v748, 920167782
      %v762 = vsel %vm754, %v745, %v761
      %v763 = vsel %vm753, %v760, %v762
      %v764 = vsel %vm752, %v742, %v745
      %v765 = vsel %vm755, %v751, 1326507024
      %v766 = vsel %vm754, %v748, %v765
      %v767 = vsel %vm753, %v764, %v766
      %v768 = vshll.u32 %v728, 8
      %v769 = vmul.u32.u64.compose %v768, %v767
      %v770 = vextract.low.u32 %v769
      %v771 = vextract.high.u32 %v769
      %v772 = vmul.u32.u64.compose %v768, %v763
      %v773 = vextract.low.u32 %v772
      %v774 = vextract.high.u32 %v772
      %v775 = vmul.u32 %v768, %v759
      %v776 = vadd.s32 %v771, %v773
      %vm777 = vc.u32 %v771, %v773
      %v778 = vadd.s32 %v774, 1
      %v779 = vsel %vm777, %v778, %v774
      %v780 = vadd.s32 %v775, %v779
      %v781 = vadd.s32 %v780, 536870912
      %v782 = vshrl.u32 %v781, 30
      %v783 = vshll.u32 %v782, 30
      %v784 = vsub.s32 %v780, %v783
      %vm785 = vcmp.lt.s32.totalorder %v784, 0
      %v786 = vsub.s32 0, %v784
      %v787 = vsel %vm785, %v786, %v784
      %v788 = vclz %v787
      %v789 = vsub.s32 %v788, 2
      %vm790 = vcmp.gt.s32.totalorder 0, %v789
      %v791 = vsel %vm790, 0, %v789
      %v792 = vsub.s32 32, %v791
      %v793 = vshll.u32 %v784, %v791
      %v794 = vshrl.u32 %v776, %v792
      %v795 = vor.u32 %v793, %v794
      %v796 = vsub.s32 4294967266, %v791
      %v797 = vadd.s32 %v796, 127
      %v798 = vshll.u32 %v797, 23
      %v799 = vor.u32 4788187, %v798
      %v800 = vand.u32 2147483647, %v799
      %v802 = vcvt.s32.f32 %v795
      %v803 = vmul.f32 %v802, %v800
      %v804 = vxor.u32 %v803, 2147483648
      %v805 = vsel %vm722, %v804, %v803
      %v806 = vsub.s32 4, %v782
      %v807 = vsel %vm722, %v806, %v782
      %v808 = vsel %vm721, %v615, %v805
      %v809 = vsel %vm721, 0, %v807
      %v810 = vcosq.f32.pop %v808
      %v811 = vsinq.f32.pop %v808
      %vm812 = vweird.f32 %v615
      %v813 = vand.u32 %v809, 3
      %vm814 = vcmp.lt.s32.totalorder %v813, 2
      %vm815 = vcmp.eq.s32.totalorder %v813, 0
      %v816 = vxor.u32 %v811, 2147483648
      %v817 = vsel %vm815, %v810, %v816
      %vm818 = vcmp.eq.s32.totalorder %v813, 2
      %v819 = vxor.u32 %v810, 2147483648
      %v820 = vsel %vm818, %v819, %v811
      %v821 = vsel %vm814, %v817, %v820
      %v822 = vsel %vm812, nan, %v821
      %v823 = vld [vmem:[%s6] sm:$0x1]
      %v824 = vmul.f32 %v614, %v823
      %v825 = vld [vmem:[%s8] sm:$0x1]
      %v826 = vadd.f32 %v824, %v825
      %v827 = vld [vmem:[%s7] sm:$0xff]
      %v828 = vld [vmem:[%s7 + $0x8] sm:$0xff]
      %v829 = vld [vmem:[%s7 + $0x10] sm:$0xff]
      %v830 = vld [vmem:[%s7 + $0x18] sm:$0xff]
      %v831 = vld [vmem:[%s7 + $0x20] sm:$0xff]
      %v832 = vld [vmem:[%s7 + $0x28] sm:$0xff]
      %v833 = vld [vmem:[%s7 + $0x30] sm:$0xff]
      %v834 = vld [vmem:[%s7 + $0x38] sm:$0xff]
      %v835 = vld [vmem:[%s7 + $0x40] sm:$0xff]
      %v836 = vld [vmem:[%s7 + $0x48] sm:$0xff]
      %v837 = vld [vmem:[%s7 + $0x50] sm:$0xff]
      %v838 = vld [vmem:[%s7 + $0x58] sm:$0xff]
      %v839 = vld [vmem:[%s7 + $0x60] sm:$0xff]
      %v840 = vld [vmem:[%s7 + $0x68] sm:$0xff]
      %v841 = vld [vmem:[%s7 + $0x70] sm:$0xff]
      %v842 = vld [vmem:[%s7 + $0x78] sm:$0xff]
      %v843 = vld [vmem:[%s7 + $0x80] sm:$0xff]
      %v844 = vld [vmem:[%s7 + $0x88] sm:$0xff]
      %v845 = vld [vmem:[%s7 + $0x90] sm:$0xff]
      %v846 = vld [vmem:[%s7 + $0x98] sm:$0xff]
      %v847 = vld [vmem:[%s7 + $0xa0] sm:$0xff]
      %v848 = vld [vmem:[%s7 + $0xa8] sm:$0xff]
      %v849 = vld [vmem:[%s7 + $0xb0] sm:$0xff]
      %v850 = vld [vmem:[%s7 + $0xb8] sm:$0xff]
      %v851 = vld [vmem:[%s7 + $0xc0] sm:$0xff]
      %v852 = vld [vmem:[%s7 + $0xc8] sm:$0xff]
      %v853 = vld [vmem:[%s7 + $0xd0] sm:$0xff]
      %v854 = vld [vmem:[%s7 + $0xd8] sm:$0xff]
      %v855 = vld [vmem:[%s7 + $0xe0] sm:$0xff]
      %v856 = vld [vmem:[%s7 + $0xe8] sm:$0xff]
      %v857 = vld [vmem:[%s7 + $0xf0] sm:$0xff]
      %v858 = vld [vmem:[%s7 + $0xf8] sm:$0xff]
      %859 = vmatprep.subr.mxu0 0.0
      %860 = vmatpush1.msra.mxu0 %v827
      %861 = vmatprep.subr.mxu0 0.0
      %862 = vmatpush1.msra.mxu0 %v828
      %863 = vmatprep.subr.mxu0 0.0
      %864 = vmatpush1.msra.mxu0 %v829
      %865 = vmatprep.subr.mxu0 0.0
      %866 = vmatpush1.msra.mxu0 %v830
      %867 = vmatprep.subr.mxu0 0.0
      %868 = vmatpush1.msra.mxu0 %v831
      %869 = vmatprep.subr.mxu0 0.0
      %870 = vmatpush1.msra.mxu0 %v832
      %871 = vmatprep.subr.mxu0 0.0
      %872 = vmatpush1.msra.mxu0 %v833
      %873 = vmatprep.subr.mxu0 0.0
      %874 = vmatpush1.msra.mxu0 %v834
      %875 = vmatprep.subr.mxu0 0.0
      %876 = vmatpush1.msra.mxu0 %v835
      %877 = vmatprep.subr.mxu0 0.0
      %878 = vmatpush1.msra.mxu0 %v836
      %879 = vmatprep.subr.mxu0 0.0
      %880 = vmatpush1.msra.mxu0 %v837
      %881 = vmatprep.subr.mxu0 0.0
      %882 = vmatpush1.msra.mxu0 %v838
      %883 = vmatprep.subr.mxu0 0.0
      %884 = vmatpush1.msra.mxu0 %v839
      %885 = vmatprep.subr.mxu0 0.0
      %886 = vmatpush1.msra.mxu0 %v840
      %887 = vmatprep.subr.mxu0 0.0
      %888 = vmatpush1.msra.mxu0 %v841
      %889 = vmatprep.subr.mxu0 0.0
      %890 = vmatpush1.msra.mxu0 %v842
      %891 = vmatprep.subr.mxu0 0.0
      %892 = vmatpush1.msra.mxu0 %v843
      %893 = vmatprep.subr.mxu0 0.0
      %894 = vmatpush1.msra.mxu0 %v844
      %895 = vmatprep.subr.mxu0 0.0
      %896 = vmatpush1.msra.mxu0 %v845
      %897 = vmatprep.subr.mxu0 0.0
      %898 = vmatpush1.msra.mxu0 %v846
      %899 = vmatprep.subr.mxu0 0.0
      %900 = vmatpush1.msra.mxu0 %v847
      %901 = vmatprep.subr.mxu0 0.0
      %902 = vmatpush1.msra.mxu0 %v848
      %903 = vmatprep.subr.mxu0 0.0
      %904 = vmatpush1.msra.mxu0 %v849
      %905 = vmatprep.subr.mxu0 0.0
      %906 = vmatpush1.msra.mxu0 %v850
      %907 = vmatprep.subr.mxu0 0.0
      %908 = vmatpush1.msra.mxu0 %v851
      %909 = vmatprep.subr.mxu0 0.0
      %910 = vmatpush1.msra.mxu0 %v852
      %911 = vmatprep.subr.mxu0 0.0
      %912 = vmatpush1.msra.mxu0 %v853
      %913 = vmatprep.subr.mxu0 0.0
      %914 = vmatpush1.msra.mxu0 %v854
      %915 = vmatprep.subr.mxu0 0.0
      %916 = vmatpush1.msra.mxu0 %v855
      %917 = vmatprep.subr.mxu0 0.0
      %918 = vmatpush1.msra.mxu0 %v856
      %919 = vmatprep.subr.mxu0 0.0
      %920 = vmatpush1.msra.mxu0 %v857
      %921 = vmatprep.subr.mxu0 0.0
      %922 = vmatpush1.msra.mxu0 %v858
      %923 = vmatprep.mubr.f32.mxu0 %v822
      %924 = vmatmul.mubr.f32.gmra.mrb[0].mxu0 %v719
      %v925 = vpop.f32.mrb[0].mxu0
      %v926 = vadd.f32 0.0, %v925
      %v927 = vpop.f32.mrb[0].mxu0
      %928 = vdwg.mxu0
      %v929 = vadd.f32 %v826, %v926
      %vm930 = vcmask 253952
      %931 = vst.msk [vmem:[%s366 + $0x40] sm:$0x1] %vm930, %v929
      %p932 = scmp.lt.s32.totalorder %s20, 1
      %s933 = scalar_select %p932, %s20, 1
      %s934 = smul.addr %s933, 9
      %s935 = smul.addr %s934, 8
      %s936 = scalar_lea.vmem %s9, %s935
      // Predicated region
      $region57: #{tpu_custom_call.1} parent=55 // pred_check
        %p937 = pneg %p242
      $region58: #{tpu_custom_call.1} parent=55 // pred_check_branch
        %939 = sbr.rel (%p937) target = $region60
      $region59: #{tpu_custom_call.1} parent=55 // pred_region
        _
      $region60: #{tpu_custom_call.1} parent=55 // pred_fallthru
        _
    $region56: #{tpu_custom_call.1} parent=5 // pred_fallthru
      _
    %p940 = scmp.le.s32.totalorder 2, %s15
    // Predicated region
    $region61: #{tpu_custom_call.1} parent=5 // pred_check
      %p941 = pneg %p940
    $region62: #{tpu_custom_call.1} parent=5 // pred_check_branch
      %943 = sbr.rel (%p941) target = $region64
    $region63: #{tpu_custom_call.1} parent=5 // pred_region
      %s944 = ssub.s32 %s15, 2
      // Predicated region
      $region65: #{tpu_custom_call.1} parent=63 // pred_check
        %p945 = pneg %p248
      $region66: #{tpu_custom_call.1} parent=63 // pred_check_branch
        %947 = sbr.rel (%p945) target = $region68
      $region67: #{tpu_custom_call.1} parent=63 // pred_region
        %p948 = scmp.lt.s32.totalorder %s21, 1
        %s949 = scalar_select %p948, %s21, 1
        %s950 = smul.addr %s949, 9
        %s951 = smul.addr %s950, 8
        %s952 = scalar_lea.vmem %s9, %s951
      $region68: #{tpu_custom_call.1} parent=63 // pred_fallthru
        _
    $region64: #{tpu_custom_call.1} parent=5 // pred_fallthru
      _
  $region6: #{tpu_custom_call.1} parent=0 // loop_footer
    %s19 = sadd.s32 1, %s15
  $region7: #{tpu_custom_call.1} parent=0 // loop_footer_branch
    %14 = sbr.rel target = $region3
  $region8: #{tpu_custom_call.1} parent=0 // loop_exit
    _

</llo_original>
